<compile_context>
chip_gen: v6e
topology: v6e:2x2x1
jax: 0.10.0
libtpu: 0.0.40
codegen_flags: <defaults>
</compile_context>

<pallas_src>
import jax
import jax.numpy as jnp
from jax.experimental import pallas as pl
from jax.experimental.pallas import tpu as pltpu


def _round_up(n: int, m: int) -> int:
    return ((n + m - 1) // m) * m


def _fuzzy_gate_kernel(x_ref, e_ref, c_ref, g_ref, w1_ref, b1_ref, w2_ref,
                       b2_ref, out_ref):
    x = x_ref[...].astype(jnp.float32)                            # (TB, F)

    # Expand features onto packed (set, feature) lanes on the MXU:
    # xk[:, s*F + f] = x[:, f]  (zero on pad lanes k >= F*n_sets).
    xk = jnp.dot(x, e_ref[...], preferred_element_type=jnp.float32)  # (TB, K_pad)

    # Gaussian memberships: one fused 128-lane exp per row-vreg (EUP).
    d = xk - c_ref[...]
    m = jnp.exp(d * d * g_ref[...])                               # (TB, K_pad) f32

    # Rule net: Linear -> ReLU -> Linear -> Sigmoid, f32 accumulation on MXU.
    h = jnp.dot(m.astype(jnp.bfloat16), w1_ref[...],
                preferred_element_type=jnp.float32)               # (TB, H)
    h = jnp.maximum(h + b1_ref[...], 0.0)
    logits = jnp.dot(h.astype(jnp.bfloat16), w2_ref[...],
                     preferred_element_type=jnp.float32)          # (TB, F)
    attn = jax.nn.sigmoid(logits + b2_ref[...])

    out_ref[...] = (x * attn).astype(out_ref.dtype)


def fuzzy_attention_gate(x, centers, sigmas, w1, b1, w2, b2, *, block_b=2048):
    """x: (B, F); centers/sigmas: (F, n_sets); w1: (H, F*n_sets); b1: (H,);
    w2: (F, H); b2: (F,).  Returns (B, F) gated features."""
    B, F = x.shape
    F_c, n_sets = centers.shape
    H = w1.shape[0]
    assert F_c == F and w1.shape[1] == F * n_sets and w2.shape == (F, H)
    assert H >= 1

    f32 = jnp.float32
    K = F * n_sets
    K_pad = _round_up(K, 128)

    # --- constant operands, packed with lane index k = s*F + f -------------
    # 0/1 expansion matrix: expand[f, k] = 1 iff k < K and k % F == f.
    f_idx = jax.lax.broadcasted_iota(jnp.int32, (F, K_pad), 0)
    k_idx = jax.lax.broadcasted_iota(jnp.int32, (F, K_pad), 1)
    expand = ((k_idx < K) & (k_idx % F == f_idx)).astype(f32)     # (F, K_pad)

    c_pack = jnp.zeros((1, K_pad), f32).at[0, :K].set(
        centers.T.astype(f32).reshape(-1))
    inv_den = -1.0 / (2.0 * sigmas.astype(f32) ** 2 + 1e-8)       # (F, n_sets)
    g_pack = jnp.full((1, K_pad), -0.5, f32).at[0, :K].set(
        inv_den.T.reshape(-1))

    # W1[h, f*n_sets + s] -> packed rows k = s*F + f; pad rows are exactly 0
    # so the exp(0)=1 pad-lane memberships never leak into h.
    w1_kh = jnp.transpose(w1.astype(f32).reshape(H, F, n_sets),
                          (2, 1, 0)).reshape(K, H)
    w1_p = jnp.zeros((K_pad, H), f32).at[:K, :].set(w1_kh).astype(jnp.bfloat16)
    b1_p = b1.astype(f32).reshape(1, H)
    w2_p = w2.astype(f32).T.astype(jnp.bfloat16)                  # (H, F)
    b2_p = b2.astype(f32).reshape(1, F)

    # --- batch tiling: rows padded only to a multiple of 8, cdiv grid ------
    B8 = _round_up(B, 8)
    x_in = x if B8 == B else jnp.zeros((B8, F), x.dtype).at[:B].set(x)
    if B8 >= 1024:
        # >= 2 tiles so ("parallel",) can shard across v7x's two TensorCores.
        TB = min(block_b, _round_up(pl.cdiv(B8, 2), 8))
    else:
        TB = B8
    grid = (pl.cdiv(B8, TB),)

    out = pl.pallas_call(
        _fuzzy_gate_kernel,
        out_shape=jax.ShapeDtypeStruct((B8, F), x.dtype),
        grid_spec=pltpu.PrefetchScalarGridSpec(
            num_scalar_prefetch=0,
            grid=grid,
            in_specs=[
                pl.BlockSpec((TB, F), lambda i: (i, 0)),          # x tile
                pl.BlockSpec((F, K_pad), lambda i: (0, 0)),       # expand matrix
                pl.BlockSpec((1, K_pad), lambda i: (0, 0)),       # centers (packed)
                pl.BlockSpec((1, K_pad), lambda i: (0, 0)),       # -1/(2s^2+eps)
                pl.BlockSpec((K_pad, H), lambda i: (0, 0)),       # W1 (packed)
                pl.BlockSpec((1, H), lambda i: (0, 0)),           # b1
                pl.BlockSpec((H, F), lambda i: (0, 0)),           # W2^T
                pl.BlockSpec((1, F), lambda i: (0, 0)),           # b2
            ],
            out_specs=pl.BlockSpec((TB, F), lambda i: (i, 0)),
        ),
        compiler_params=pltpu.CompilerParams(
            dimension_semantics=("parallel",),
        ),
    )(x_in, expand, c_pack, g_pack, w1_p, b1_p, w2_p, b2_p)

    return out if B8 == B else out[:B]


def fuzzy_attention_gate_ref(x, centers, sigmas, w1, b1, w2, b2):
    """Pure-JAX reference mirroring the PyTorch forward."""
    m = jnp.exp(-(x[..., None] - centers[None]) ** 2
                / (2.0 * sigmas[None] ** 2 + 1e-8))               # (B, F, n_sets)
    mf = m.reshape(x.shape[0], -1)                                # (B, F*n_sets)
    h = jnp.maximum(mf @ w1.T + b1, 0.0)
    attn = jax.nn.sigmoid(h @ w2.T + b2)
    return x * attn


if __name__ == "__main__":
    key = jax.random.PRNGKey(0)
    B, F, n_sets = 2, 16, 3
    H = F // 2

    k1, k2, k3, k4, k5 = jax.random.split(key, 5)
    x = jax.random.uniform(k1, (B, F), jnp.float32)
    centers = jnp.tile(jnp.linspace(0.0, 1.0, n_sets)[None, :], (F, 1))
    sigmas = jnp.full((F, n_sets), 0.4, jnp.float32)
    w1 = 0.1 * jax.random.normal(k2, (H, F * n_sets), jnp.float32)
    b1 = 0.1 * jax.random.normal(k3, (H,), jnp.float32)
    w2 = 0.1 * jax.random.normal(k4, (F, H), jnp.float32)
    b2 = 0.1 * jax.random.normal(k5, (F,), jnp.float32)

    out = fuzzy_attention_gate(x, centers, sigmas, w1, b1, w2, b2)
    out = jax.block_until_ready(out)

    ref = fuzzy_attention_gate_ref(x, centers, sigmas, w1, b1, w2, b2)
    assert out.shape == (B, F)
    max_err = float(jnp.max(jnp.abs(out - ref)))
    assert max_err < 5e-2, f"max abs error {max_err}"

    print("KERNEL_OK")
</pallas_src>

<mosaic_0001>
module attributes {stable_mosaic.version = 11 : i64} {
  func.func @_fuzzy_gate_kernel(%arg0: i32, %arg1: memref<8x16xf32, #tpu.memory_space<vmem>>, %arg2: memref<16x128xf32, #tpu.memory_space<vmem>>, %arg3: memref<1x128xf32, #tpu.memory_space<vmem>>, %arg4: memref<1x128xf32, #tpu.memory_space<vmem>>, %arg5: memref<128x8xbf16, #tpu.memory_space<vmem>>, %arg6: memref<1x8xf32, #tpu.memory_space<vmem>>, %arg7: memref<8x16xbf16, #tpu.memory_space<vmem>>, %arg8: memref<1x16xf32, #tpu.memory_space<vmem>>, %arg9: memref<8x16xf32, #tpu.memory_space<vmem>>) attributes {dimension_semantics = [#tpu.dimension_semantics<parallel>], iteration_bounds = array<i64: 1>, scalar_prefetch = 0 : i64, scratch_operands = 0 : i64, tpu.core_type = #tpu.core_type<tc>, window_params = [{transform_indices = @transform_0, window_bounds = array<i64: 8, 16>}, {pipeline_mode = #tpu.pipeline_mode<synchronous>, transform_indices = @transform_1, window_bounds = array<i64: 16, 128>}, {pipeline_mode = #tpu.pipeline_mode<synchronous>, transform_indices = @transform_2, window_bounds = array<i64: 1, 128>}, {pipeline_mode = #tpu.pipeline_mode<synchronous>, transform_indices = @transform_3, window_bounds = array<i64: 1, 128>}, {pipeline_mode = #tpu.pipeline_mode<synchronous>, transform_indices = @transform_4, window_bounds = array<i64: 128, 8>}, {pipeline_mode = #tpu.pipeline_mode<synchronous>, transform_indices = @transform_5, window_bounds = array<i64: 1, 8>}, {pipeline_mode = #tpu.pipeline_mode<synchronous>, transform_indices = @transform_6, window_bounds = array<i64: 8, 16>}, {pipeline_mode = #tpu.pipeline_mode<synchronous>, transform_indices = @transform_7, window_bounds = array<i64: 1, 16>}, {transform_indices = @transform_8, window_bounds = array<i64: 8, 16>}]} {
    %c0 = arith.constant 0 : index
    %c0_0 = arith.constant 0 : index
    %0 = vector.load %arg1[%c0, %c0_0] : memref<8x16xf32, #tpu.memory_space<vmem>>, vector<8x16xf32>
    %c0_1 = arith.constant 0 : index
    %c0_2 = arith.constant 0 : index
    %1 = vector.load %arg2[%c0_1, %c0_2] : memref<16x128xf32, #tpu.memory_space<vmem>>, vector<16x128xf32>
    %cst = arith.constant dense<0.000000e+00> : vector<8x128xf32>
    %2 = tpu.matmul %0, %1, %cst {dimension_numbers = #tpu.dot_dimension_numbers<[1], [0], [0], [1], [0, 0, 1, 1], [], []>} : vector<8x16xf32>, vector<16x128xf32>, vector<8x128xf32> -> vector<8x128xf32>
    %c0_3 = arith.constant 0 : index
    %c0_4 = arith.constant 0 : index
    %3 = vector.load %arg3[%c0_3, %c0_4] : memref<1x128xf32, #tpu.memory_space<vmem>>, vector<1x128xf32>
    %4 = vector.broadcast %3 : vector<1x128xf32> to vector<8x128xf32>
    %5 = arith.subf %2, %4 : vector<8x128xf32>
    %6 = arith.mulf %5, %5 : vector<8x128xf32>
    %c0_5 = arith.constant 0 : index
    %c0_6 = arith.constant 0 : index
    %7 = vector.load %arg4[%c0_5, %c0_6] : memref<1x128xf32, #tpu.memory_space<vmem>>, vector<1x128xf32>
    %8 = vector.broadcast %7 : vector<1x128xf32> to vector<8x128xf32>
    %9 = arith.mulf %6, %8 : vector<8x128xf32>
    %10 = math.exp %9 : vector<8x128xf32>
    %11 = arith.truncf %10 : vector<8x128xf32> to vector<8x128xbf16>
    %c0_7 = arith.constant 0 : index
    %c0_8 = arith.constant 0 : index
    %12 = vector.load %arg5[%c0_7, %c0_8] : memref<128x8xbf16, #tpu.memory_space<vmem>>, vector<128x8xbf16>
    %cst_9 = arith.constant dense<0.000000e+00> : vector<8x8xf32>
    %13 = tpu.matmul %11, %12, %cst_9 {dimension_numbers = #tpu.dot_dimension_numbers<[1], [0], [0], [1], [0, 0, 1, 1], [], []>} : vector<8x128xbf16>, vector<128x8xbf16>, vector<8x8xf32> -> vector<8x8xf32>
    %c0_10 = arith.constant 0 : index
    %c0_11 = arith.constant 0 : index
    %14 = vector.load %arg6[%c0_10, %c0_11] : memref<1x8xf32, #tpu.memory_space<vmem>>, vector<1x8xf32>
    %15 = vector.broadcast %14 : vector<1x8xf32> to vector<8x8xf32>
    %16 = arith.addf %13, %15 : vector<8x8xf32>
    %cst_12 = arith.constant 0.000000e+00 : f32
    %17 = vector.broadcast %cst_12 : f32 to vector<8x8xf32>
    %18 = arith.maximumf %16, %17 : vector<8x8xf32>
    %19 = arith.truncf %18 : vector<8x8xf32> to vector<8x8xbf16>
    %c0_13 = arith.constant 0 : index
    %c0_14 = arith.constant 0 : index
    %20 = vector.load %arg7[%c0_13, %c0_14] : memref<8x16xbf16, #tpu.memory_space<vmem>>, vector<8x16xbf16>
    %cst_15 = arith.constant dense<0.000000e+00> : vector<8x16xf32>
    %21 = tpu.matmul %19, %20, %cst_15 {dimension_numbers = #tpu.dot_dimension_numbers<[1], [0], [0], [1], [0, 0, 1, 1], [], []>} : vector<8x8xbf16>, vector<8x16xbf16>, vector<8x16xf32> -> vector<8x16xf32>
    %c0_16 = arith.constant 0 : index
    %c0_17 = arith.constant 0 : index
    %22 = vector.load %arg8[%c0_16, %c0_17] : memref<1x16xf32, #tpu.memory_space<vmem>>, vector<1x16xf32>
    %23 = vector.broadcast %22 : vector<1x16xf32> to vector<8x16xf32>
    %24 = arith.addf %21, %23 : vector<8x16xf32>
    %25 = arith.negf %24 : vector<8x16xf32>
    %26 = math.exp %25 : vector<8x16xf32>
    %cst_18 = arith.constant 1.000000e+00 : f32
    %27 = vector.broadcast %cst_18 : f32 to vector<8x16xf32>
    %28 = arith.addf %27, %26 : vector<8x16xf32>
    %29 = arith.divf %27, %28 : vector<8x16xf32>
    %30 = arith.mulf %0, %29 : vector<8x16xf32>
    %c0_19 = arith.constant 0 : index
    %c0_20 = arith.constant 0 : index
    %31 = vector.load %arg9[%c0_19, %c0_20] : memref<8x16xf32, #tpu.memory_space<vmem>>, vector<8x16xf32>
    tpu.vector_store %arg9[%c0_19, %c0_20], %30 {strides = array<i32>} : memref<8x16xf32, #tpu.memory_space<vmem>>, vector<8x16xf32>,
    return
  }
  func.func @transform_0(%arg0: i32) -> (i32, i32) {
    %c0_i32 = arith.constant 0 : i32
    %c0_i32_0 = arith.constant 0 : i32
    return %arg0, %c0_i32 : i32, i32
  }
  func.func @transform_1(%arg0: i32) -> (i32, i32) {
    %c0_i32 = arith.constant 0 : i32
    %c0_i32_0 = arith.constant 0 : i32
    %c0_i32_1 = arith.constant 0 : i32
    return %c0_i32, %c0_i32_0 : i32, i32
  }
  func.func @transform_2(%arg0: i32) -> (i32, i32) {
    %c0_i32 = arith.constant 0 : i32
    %c0_i32_0 = arith.constant 0 : i32
    %c0_i32_1 = arith.constant 0 : i32
    return %c0_i32, %c0_i32_0 : i32, i32
  }
  func.func @transform_3(%arg0: i32) -> (i32, i32) {
    %c0_i32 = arith.constant 0 : i32
    %c0_i32_0 = arith.constant 0 : i32
    %c0_i32_1 = arith.constant 0 : i32
    return %c0_i32, %c0_i32_0 : i32, i32
  }
  func.func @transform_4(%arg0: i32) -> (i32, i32) {
    %c0_i32 = arith.constant 0 : i32
    %c0_i32_0 = arith.constant 0 : i32
    %c0_i32_1 = arith.constant 0 : i32
    return %c0_i32, %c0_i32_0 : i32, i32
  }
  func.func @transform_5(%arg0: i32) -> (i32, i32) {
    %c0_i32 = arith.constant 0 : i32
    %c0_i32_0 = arith.constant 0 : i32
    %c0_i32_1 = arith.constant 0 : i32
    return %c0_i32, %c0_i32_0 : i32, i32
  }
  func.func @transform_6(%arg0: i32) -> (i32, i32) {
    %c0_i32 = arith.constant 0 : i32
    %c0_i32_0 = arith.constant 0 : i32
    %c0_i32_1 = arith.constant 0 : i32
    return %c0_i32, %c0_i32_0 : i32, i32
  }
  func.func @transform_7(%arg0: i32) -> (i32, i32) {
    %c0_i32 = arith.constant 0 : i32
    %c0_i32_0 = arith.constant 0 : i32
    %c0_i32_1 = arith.constant 0 : i32
    return %c0_i32, %c0_i32_0 : i32, i32
  }
  func.func @transform_8(%arg0: i32) -> (i32, i32) {
    %c0_i32 = arith.constant 0 : i32
    %c0_i32_0 = arith.constant 0 : i32
    return %arg0, %c0_i32 : i32, i32
  }
}

</mosaic_0001>

<llo_original>
// kernel: tpu_custom_call.1
$region0: #{tpu_custom_call.1}
  #allocation0 [shape = 'u32[]', space=smem, size = 0x4, offset = 0x4, fixed_abs, tag = 'smem constant byte address 0x4 - core index']
  #allocation1 [shape = 'u32[144,128]{1,0:T(1,128)}', space=vmem, size = 0x12000, scoped, tag = 'internal scratch']
  %s0 = inlined_call_operand.vmem [shape: f32[8,16], index: 0, kind: input, shape index: {}]
  %s1 = inlined_call_operand.vmem [shape: f32[16,128], index: 1, kind: input, shape index: {}]
  %s2 = inlined_call_operand.vmem [shape: f32[1,128], index: 2, kind: input, shape index: {}]
  %s3 = inlined_call_operand.vmem [shape: f32[1,128], index: 3, kind: input, shape index: {}]
  %s4 = inlined_call_operand.vmem [shape: bf16[128,8], index: 4, kind: input, shape index: {}]
  %s5 = inlined_call_operand.vmem [shape: f32[1,8], index: 5, kind: input, shape index: {}]
  %s6 = inlined_call_operand.vmem [shape: bf16[8,16], index: 6, kind: input, shape index: {}]
  %s7 = inlined_call_operand.vmem [shape: f32[1,16], index: 7, kind: input, shape index: {}]
  %s8 = inlined_call_operand.hbm [shape: f32[8,16], index: 8, kind: output, shape index: {}]
  %s9 = sld [smem:[#allocation0]]
  $region42: #{tpu_custom_call.1} parent=0
    _
  %s11 = ssub.s32 1, %s9
  %s12 = scalar_select 0, %s11, %s9
  $region1: #{tpu_custom_call.1} parent=0
    #allocation2 [shape = 'u8[4096]{0}', space=vmem, size = 0x1000, scoped, tag = 'output window, operand 0, single buffered']
    #allocation3 [shape = 's32[1]{0}', space=sflag, size = 0x4, scoped, tag = 'scoped memory for tpu_custom_call.1']
    %13 = vsyncpa [#allocation3], 0
    // Predicated region
    $region2: #{tpu_custom_call.1} parent=1 // pred_check
      _
    $region3: #{tpu_custom_call.1} parent=1 // pred_check_branch
      %15 = sbr.rel (0) target = $region5
    $region4: #{tpu_custom_call.1} parent=1 // pred_region
      _
    $region5: #{tpu_custom_call.1} parent=1 // pred_fallthru
      _
    // Predicated region
    $region6: #{tpu_custom_call.1} parent=1 // pred_check
      _
    $region7: #{tpu_custom_call.1} parent=1 // pred_check_branch
      %17 = sbr.rel (0) target = $region9
    $region8: #{tpu_custom_call.1} parent=1 // pred_region
      _
    $region9: #{tpu_custom_call.1} parent=1 // pred_fallthru
      _
    // Predicated region
    $region10: #{tpu_custom_call.1} parent=1 // pred_check
      _
    $region11: #{tpu_custom_call.1} parent=1 // pred_check_branch
      %19 = sbr.rel (0) target = $region13
    $region12: #{tpu_custom_call.1} parent=1 // pred_region
      _
    $region13: #{tpu_custom_call.1} parent=1 // pred_fallthru
      _
    // Predicated region
    $region14: #{tpu_custom_call.1} parent=1 // pred_check
      _
    $region15: #{tpu_custom_call.1} parent=1 // pred_check_branch
      %21 = sbr.rel (0) target = $region17
    $region16: #{tpu_custom_call.1} parent=1 // pred_region
      _
    $region17: #{tpu_custom_call.1} parent=1 // pred_fallthru
      _
    // Predicated region
    $region18: #{tpu_custom_call.1} parent=1 // pred_check
      _
    $region19: #{tpu_custom_call.1} parent=1 // pred_check_branch
      %23 = sbr.rel (0) target = $region21
    $region20: #{tpu_custom_call.1} parent=1 // pred_region
      _
    $region21: #{tpu_custom_call.1} parent=1 // pred_fallthru
      _
    // Predicated region
    $region22: #{tpu_custom_call.1} parent=1 // pred_check
      _
    $region23: #{tpu_custom_call.1} parent=1 // pred_check_branch
      %25 = sbr.rel (0) target = $region25
    $region24: #{tpu_custom_call.1} parent=1 // pred_region
      _
    $region25: #{tpu_custom_call.1} parent=1 // pred_fallthru
      _
    // Predicated region
    $region26: #{tpu_custom_call.1} parent=1 // pred_check
      _
    $region27: #{tpu_custom_call.1} parent=1 // pred_check_branch
      %27 = sbr.rel (0) target = $region29
    $region28: #{tpu_custom_call.1} parent=1 // pred_region
      _
    $region29: #{tpu_custom_call.1} parent=1 // pred_fallthru
      _
    // Predicated region
    $region30: #{tpu_custom_call.1} parent=1 // pred_check
      _
    $region31: #{tpu_custom_call.1} parent=1 // pred_check_branch
      %29 = sbr.rel (0) target = $region33
    $region32: #{tpu_custom_call.1} parent=1 // pred_region
      _
    $region33: #{tpu_custom_call.1} parent=1 // pred_fallthru
      _
    %v31 = vld [vmem:[%s0] sm:$0xff]
    %v32 = vld [vmem:[%s1] sm:$0xff]
    %v33 = vld [vmem:[%s1 + $0x8] sm:$0xff]
    %vm34 = vcmask 130048
    %v36 = vsel %vm34, %v31, 0
    %38 = vmatprep.subr.mxu0 0.0
    %39 = vmatpush1.msra.mxu0 0.0
    %40 = vmatprep.subr.mxu0 0.0
    %41 = vmatpush1.msra.mxu0 0.0
    %42 = vmatprep.subr.mxu0 0.0
    %43 = vmatpush1.msra.mxu0 0.0
    %44 = vmatprep.subr.mxu0 0.0
    %45 = vmatpush1.msra.mxu0 0.0
    %46 = vmatprep.subr.mxu0 0.0
    %47 = vmatpush1.msra.mxu0 0.0
    %48 = vmatprep.subr.mxu0 0.0
    %49 = vmatpush1.msra.mxu0 0.0
    %50 = vmatprep.subr.mxu0 0.0
    %51 = vmatpush1.msra.mxu0 0.0
    %52 = vmatprep.subr.mxu0 0.0
    %53 = vmatpush1.msra.mxu0 0.0
    %54 = vmatprep.subr.mxu0 0.0
    %55 = vmatpush1.msra.mxu0 0.0
    %56 = vmatprep.subr.mxu0 0.0
    %57 = vmatpush1.msra.mxu0 0.0
    %58 = vmatprep.subr.mxu0 0.0
    %59 = vmatpush1.msra.mxu0 0.0
    %60 = vmatprep.subr.mxu0 0.0
    %61 = vmatpush1.msra.mxu0 0.0
    %62 = vmatprep.subr.mxu0 0.0
    %63 = vmatpush1.msra.mxu0 0.0
    %64 = vmatprep.subr.mxu0 0.0
    %65 = vmatpush1.msra.mxu0 0.0
    %66 = vmatprep.subr.mxu0 0.0
    %67 = vmatpush1.msra.mxu0 %v33
    %68 = vmatprep.subr.mxu0 0.0
    %69 = vmatpush1.msra.mxu0 %v32
    %70 = vmatprep.subr.mxu0 0.0
    %71 = vmatpush2.msra.mxu0 0.0
    %72 = vmatprep.subr.mxu0 0.0
    %73 = vmatpush2.msra.mxu0 0.0
    %74 = vmatprep.subr.mxu0 0.0
    %75 = vmatpush2.msra.mxu0 0.0
    %76 = vmatprep.subr.mxu0 0.0
    %77 = vmatpush2.msra.mxu0 0.0
    %78 = vmatprep.subr.mxu0 0.0
    %79 = vmatpush2.msra.mxu0 0.0
    %80 = vmatprep.subr.mxu0 0.0
    %81 = vmatpush2.msra.mxu0 0.0
    %82 = vmatprep.subr.mxu0 0.0
    %83 = vmatpush2.msra.mxu0 0.0
    %84 = vmatprep.subr.mxu0 0.0
    %85 = vmatpush2.msra.mxu0 0.0
    %86 = vmatprep.subr.mxu0 0.0
    %87 = vmatpush2.msra.mxu0 0.0
    %88 = vmatprep.subr.mxu0 0.0
    %89 = vmatpush2.msra.mxu0 0.0
    %90 = vmatprep.subr.mxu0 0.0
    %91 = vmatpush2.msra.mxu0 0.0
    %92 = vmatprep.subr.mxu0 0.0
    %93 = vmatpush2.msra.mxu0 0.0
    %94 = vmatprep.subr.mxu0 0.0
    %95 = vmatpush2.msra.mxu0 0.0
    %96 = vmatprep.subr.mxu0 0.0
    %97 = vmatpush2.msra.mxu0 0.0
    %98 = vmatprep.subr.mxu0 0.0
    %99 = vmatpush2.msra.mxu0 0.0
    %100 = vmatprep.subr.mxu0 0.0
    %101 = vmatpush2.msra.mxu0 0.0
    %102 = vmatprep.mubr.f32.mxu0 0.0
    %103 = vmatmul.mubr.f32.gmra.mxu0 %v36
    %v104 = vpop.f32.mrf.mxu0
    %v105 = vadd.f32 0.0, %v104
    %v106 = vpop.f32.mrf.mxu0
    %107 = vdwg.mxu0
    %v108 = vld [vmem:[%s2] sm:$0x1]
    %v110 = vlaneseq
    %v111 = vshrl.u32 %v110, 7
    %v112 = vsub.s32 0, %v111
    %v113 = vrot.slane %v108, %v112
    %v115 = vsub.f32 %v105, %v113
    %v116 = vmul.f32 %v115, %v115
    %v117 = vld [vmem:[%s3] sm:$0x1]
    %v119 = vlaneseq
    %v120 = vshrl.u32 %v119, 7
    %v121 = vsub.s32 0, %v120
    %v122 = vrot.slane %v117, %v121
    %v124 = vmul.f32 %v116, %v122
    %v125 = vmul.f32 %v124, 1.442695
    %v126 = vpow.pop %v125
    %v127 = vpack.c.bf16 %v126, %v126
    %v128 = vld [vmem:[%s4] sm:$0xf]
    %v129 = vld [vmem:[%s4 + $0x4] sm:$0xf]
    %v130 = vld [vmem:[%s4 + $0x8] sm:$0xf]
    %v131 = vld [vmem:[%s4 + $0xc] sm:$0xf]
    %v132 = vld [vmem:[%s4 + $0x10] sm:$0xf]
    %v133 = vld [vmem:[%s4 + $0x14] sm:$0xf]
    %v134 = vld [vmem:[%s4 + $0x18] sm:$0xf]
    %v135 = vld [vmem:[%s4 + $0x1c] sm:$0xf]
    %v136 = vld [vmem:[%s4 + $0x20] sm:$0xf]
    %v137 = vld [vmem:[%s4 + $0x24] sm:$0xf]
    %v138 = vld [vmem:[%s4 + $0x28] sm:$0xf]
    %v139 = vld [vmem:[%s4 + $0x2c] sm:$0xf]
    %v140 = vld [vmem:[%s4 + $0x30] sm:$0xf]
    %v141 = vld [vmem:[%s4 + $0x34] sm:$0xf]
    %v142 = vld [vmem:[%s4 + $0x38] sm:$0xf]
    %v143 = vld [vmem:[%s4 + $0x3c] sm:$0xf]
    %v144 = vld [vmem:[%s5] sm:$0x1]
    %v146 = vlaneseq
    %v147 = vshrl.u32 %v146, 7
    %v148 = vsub.s32 0, %v147
    %v149 = vrot.slane %v144, %v148
    %v167 = vunpack.c.l.b16 %v128
    %v168 = vunpack.c.l.b16 %v129
    %v169 = vunpack.c.l.b16 %v130
    %v170 = vunpack.c.l.b16 %v131
    %v171 = vunpack.c.l.b16 %v132
    %v172 = vunpack.c.l.b16 %v133
    %v173 = vunpack.c.l.b16 %v134
    %v174 = vunpack.c.l.b16 %v135
    %v175 = vunpack.c.l.b16 %v136
    %v176 = vunpack.c.l.b16 %v137
    %v177 = vunpack.c.l.b16 %v138
    %v178 = vunpack.c.l.b16 %v139
    %v179 = vunpack.c.l.b16 %v140
    %v180 = vunpack.c.l.b16 %v141
    %v181 = vunpack.c.l.b16 %v142
    %v182 = vunpack.c.l.b16 %v143
    %v183 = vpack.c.b16 %v168, %v167
    %v184 = vpack.c.b16 %v170, %v169
    %v185 = vpack.c.b16 %v172, %v171
    %v186 = vpack.c.b16 %v174, %v173
    %v187 = vpack.c.b16 %v176, %v175
    %v188 = vpack.c.b16 %v178, %v177
    %v189 = vpack.c.b16 %v180, %v179
    %v190 = vpack.c.b16 %v182, %v181
    %199 = vmatprep.subr.bf16.mxu0 0
    %200 = vmatpush1.bf16.msra.mxu0 %v190
    %201 = vmatprep.subr.bf16.mxu0 0
    %202 = vmatpush1.bf16.msra.mxu0 %v189
    %203 = vmatprep.subr.bf16.mxu0 0
    %204 = vmatpush1.bf16.msra.mxu0 %v188
    %205 = vmatprep.subr.bf16.mxu0 0
    %206 = vmatpush1.bf16.msra.mxu0 %v187
    %207 = vmatprep.subr.bf16.mxu0 0
    %208 = vmatpush1.bf16.msra.mxu0 %v186
    %209 = vmatprep.subr.bf16.mxu0 0
    %210 = vmatpush1.bf16.msra.mxu0 %v185
    %211 = vmatprep.subr.bf16.mxu0 0
    %212 = vmatpush1.bf16.msra.mxu0 %v184
    %213 = vmatprep.subr.bf16.mxu0 0
    %214 = vmatpush1.bf16.msra.mxu0 %v183
    %215 = vmatprep.subr.bf16.mxu0 0
    %216 = vmatpush2.bf16.msra.mxu0 0
    %217 = vmatprep.subr.bf16.mxu0 0
    %218 = vmatpush2.bf16.msra.mxu0 0
    %219 = vmatprep.subr.bf16.mxu0 0
    %220 = vmatpush2.bf16.msra.mxu0 0
    %221 = vmatprep.subr.bf16.mxu0 0
    %222 = vmatpush2.bf16.msra.mxu0 0
    %223 = vmatprep.subr.bf16.mxu0 0
    %224 = vmatpush2.bf16.msra.mxu0 0
    %225 = vmatprep.subr.bf16.mxu0 0
    %226 = vmatpush2.bf16.msra.mxu0 0
    %227 = vmatprep.subr.bf16.mxu0 0
    %228 = vmatpush2.bf16.msra.mxu0 0
    %229 = vmatprep.subr.bf16.mxu0 0
    %230 = vmatpush2.bf16.msra.mxu0 0
    %231 = vmatprep.mubr.bf16.mxu0 0
    %232 = vmatmul.mubr.bf16.gmra.mxu0 %v127
    %v233 = vpop.f32.mrf.mxu0
    %v234 = vadd.f32 %v149, %v233
    %v235 = vpop.f32.mrf.mxu0
    %v236 = vpop.f32.mrf.mxu0
    %v237 = vpop.f32.mrf.mxu0
    %238 = vdwg.mxu0
    %v239 = vmax.f32 %v234, 0.0
    %v240 = vpack.c.bf16 %v239, %v239
    %v241 = vld [vmem:[%s6] sm:$0xf]
    %v242 = vld [vmem:[%s7] sm:$0x1]
    %v244 = vlaneseq
    %v245 = vshrl.u32 %v244, 7
    %v246 = vsub.s32 0, %v245
    %v247 = vrot.slane %v242, %v246
    %vm249 = vcmask 64512
    %v251 = vsel %vm249, %v240, 0
    %vm253 = vcmask 1043456
    %v255 = vsel %vm253, %v241, 0
    %257 = vmatprep.subr.bf16.mxu0 0
    %258 = vmatpush1.bf16.msra.mxu0 0
    %259 = vmatprep.subr.bf16.mxu0 0
    %260 = vmatpush1.bf16.msra.mxu0 0
    %261 = vmatprep.subr.bf16.mxu0 0
    %262 = vmatpush1.bf16.msra.mxu0 0
    %263 = vmatprep.subr.bf16.mxu0 0
    %264 = vmatpush1.bf16.msra.mxu0 0
    %265 = vmatprep.subr.bf16.mxu0 0
    %266 = vmatpush1.bf16.msra.mxu0 0
    %267 = vmatprep.subr.bf16.mxu0 0
    %268 = vmatpush1.bf16.msra.mxu0 0
    %269 = vmatprep.subr.bf16.mxu0 0
    %270 = vmatpush1.bf16.msra.mxu0 0
    %271 = vmatprep.subr.bf16.mxu0 0
    %272 = vmatpush1.bf16.msra.mxu0 %v255
    %273 = vmatprep.subr.bf16.mxu0 0
    %274 = vmatpush2.bf16.msra.mxu0 0
    %275 = vmatprep.subr.bf16.mxu0 0
    %276 = vmatpush2.bf16.msra.mxu0 0
    %277 = vmatprep.subr.bf16.mxu0 0
    %278 = vmatpush2.bf16.msra.mxu0 0
    %279 = vmatprep.subr.bf16.mxu0 0
    %280 = vmatpush2.bf16.msra.mxu0 0
    %281 = vmatprep.subr.bf16.mxu0 0
    %282 = vmatpush2.bf16.msra.mxu0 0
    %283 = vmatprep.subr.bf16.mxu0 0
    %284 = vmatpush2.bf16.msra.mxu0 0
    %285 = vmatprep.subr.bf16.mxu0 0
    %286 = vmatpush2.bf16.msra.mxu0 0
    %287 = vmatprep.subr.bf16.mxu0 0
    %288 = vmatpush2.bf16.msra.mxu0 0
    %289 = vmatprep.mubr.bf16.mxu0 0
    %290 = vmatmul.mubr.bf16.gmra.mxu0 %v251
    %v291 = vpop.f32.mrf.mxu0
    %v292 = vadd.f32 %v247, %v291
    %v293 = vpop.f32.mrf.mxu0
    %v294 = vpop.f32.mrf.mxu0
    %v295 = vpop.f32.mrf.mxu0
    %296 = vdwg.mxu0
    %v297 = vxor.u32 %v292, 2147483648
    %v298 = vmul.f32 %v297, 1.442695
    %v299 = vpow.pop %v298
    %v300 = vadd.f32 %v299, 1.0
    %v301 = vrcp.pop %v300
    %v302 = vmul.f32 1.0, %v301
    %v303 = vmul.f32 %v31, %v302
    %304 = vst.msk [vmem:[#allocation2] sm:$0xff] %vm34, %v303
    // Predicated region
    $region34: #{tpu_custom_call.1} parent=1 // pred_check
      _
    $region35: #{tpu_custom_call.1} parent=1 // pred_check_branch
      %306 = sbr.rel (0) target = $region37
    $region36: #{tpu_custom_call.1} parent=1 // pred_region
      %s308 = ssub.s32 128, 128
      %309 = vsyncadd [#allocation3], %s308
      %s311 = sshll.u32 [#allocation2], 4
      %s312 = int_to_ptr.vmem [resolvable:$true] %s311
      %314 = dma.vmem_to_hbm [thread:$0]  %s312, 128, %s8, [#allocation3]
    $region37: #{tpu_custom_call.1} parent=1 // pred_fallthru
      _
    // Predicated region
    $region38: #{tpu_custom_call.1} parent=1 // pred_check
      _
    $region39: #{tpu_custom_call.1} parent=1 // pred_check_branch
      %316 = sbr.rel (0) target = $region41
    $region40: #{tpu_custom_call.1} parent=1 // pred_region
      %317 = dma.done [#allocation3], 128
    $region41: #{tpu_custom_call.1} parent=1 // pred_fallthru
      _
    %318 = vsyncpa [#allocation3], 1

</llo_original>
